<compile_context>
chip_gen: v7x
topology: tpu7x:2x2x1
jax: 0.10.0
libtpu: 0.0.40
codegen_flags: <defaults>
</compile_context>

<pallas_src>
import jax
import jax.numpy as jnp
from jax.experimental import pallas as pl
from jax.experimental.pallas import tpu as pltpu

LANE = 128
SUBLANE = 8
OUT_PAD = 8   # small padded output width; the real Q-value lives in column 0


def _round_up(x, m):
    return (x + m - 1) // m * m


def critic_kernel(s_ref, a_ref, w1s_ref, w1a_ref, b1_ref,
                  w2_ref, b2_ref, w3_ref, b3_ref, out_ref):
    # Layer 1: concat-free Linear + ReLU
    h1 = jnp.dot(s_ref[...], w1s_ref[...], preferred_element_type=jnp.float32)
    h1 = h1 + jnp.dot(a_ref[...], w1a_ref[...], preferred_element_type=jnp.float32)
    h1 = jnp.maximum(h1 + b1_ref[...], 0.0)
    # Layer 2: Linear + ReLU
    h2 = jnp.dot(h1, w2_ref[...], preferred_element_type=jnp.float32) + b2_ref[...]
    h2 = jnp.maximum(h2, 0.0)
    # Layer 3: Linear (padded to OUT_PAD output columns; real value in col 0)
    out_ref[...] = (jnp.dot(h2, w3_ref[...], preferred_element_type=jnp.float32)
                    + b3_ref[...])


def critic_forward(state, action, params, *, block_b=2048):
    """state: (B, ds) f32; action: (B, da) f32; params: dict of (in,out) W + (1,out) b."""
    B, ds = state.shape
    da = action.shape[1]
    H = params["w1"].shape[1]

    # Row tile: large to amortize per-step overhead, capped at ceil(B/2) so the
    # grid has >= 2 independent steps when possible (v7x megacore sharding).
    # Always a multiple of 8 (sublane alignment).
    tb = min(block_b, _round_up(max(pl.cdiv(B, 2), 1), SUBLANE))
    grid = (pl.cdiv(B, tb),)   # no wrapper padding; partial last block is masked

    # Split W1 so torch.cat([state, action], 1) never materializes.
    w1s = params["w1"][:ds]
    w1a = params["w1"][ds:]
    # Pad the last layer to OUT_PAD output columns (done once in the wrapper).
    w3p = jnp.pad(params["w3"], ((0, 0), (0, OUT_PAD - params["w3"].shape[1])))
    b3p = jnp.pad(params["b3"], ((0, 0), (0, OUT_PAD - params["b3"].shape[1])))

    def row_spec(shape):        # tiled along the batch axis
        return pl.BlockSpec(shape, lambda i: (i, 0))

    def const_spec(shape):      # VMEM-resident across all batch tiles
        return pl.BlockSpec(shape, lambda i: (0, 0))

    out = pl.pallas_call(
        critic_kernel,
        out_shape=jax.ShapeDtypeStruct((B, OUT_PAD), jnp.float32),
        grid=grid,
        in_specs=[
            row_spec((tb, ds)),          # state tile
            row_spec((tb, da)),          # action tile
            const_spec((ds, H)),         # W1[:ds]
            const_spec((da, H)),         # W1[ds:]
            const_spec((1, H)),          # b1
            const_spec((H, H)),          # W2
            const_spec((1, H)),          # b2
            const_spec((H, OUT_PAD)),    # W3 (padded)
            const_spec((1, OUT_PAD)),    # b3 (padded)
        ],
        out_specs=row_spec((tb, OUT_PAD)),
        compiler_params=pltpu.CompilerParams(
            # batch tiles are independent -> shard across v7x's 2 TensorCores
            dimension_semantics=("parallel",),
        ),
    )(state, action, w1s, w1a, params["b1"],
      params["w2"], params["b2"], w3p, b3p)

    # Keep only the real Q-value column.
    return out[:, :1]


def xavier_uniform(key, fan_in, fan_out):
    # Matches torch.nn.init.xavier_uniform_ with gain=1.
    limit = (6.0 / (fan_in + fan_out)) ** 0.5
    return jax.random.uniform(
        key, (fan_in, fan_out), dtype=jnp.float32, minval=-limit, maxval=limit
    )


def init_critic_params(key, input_size, hidden_size):
    k1, k2, k3 = jax.random.split(key, 3)
    return {
        # Weights stored as (in, out) == W.T of the PyTorch (out, in) layout.
        "w1": xavier_uniform(k1, input_size, hidden_size),
        "b1": jnp.zeros((1, hidden_size), jnp.float32),
        "w2": xavier_uniform(k2, hidden_size, hidden_size),
        "b2": jnp.zeros((1, hidden_size), jnp.float32),
        "w3": xavier_uniform(k3, hidden_size, 1),
        "b3": jnp.zeros((1, 1), jnp.float32),
    }


# TODO(synk): the optimizer / target-network copy logic of DDPG-HER is host-side
# training plumbing, not part of the Critic forward pass, so only forward() is a kernel.


if __name__ == "__main__":
    state_size, action_size, hidden_size = 16, 4, 32
    input_size = state_size + action_size
    batch = 8

    key = jax.random.PRNGKey(0)
    kp, ks, ka = jax.random.split(key, 3)
    params = init_critic_params(kp, input_size, hidden_size)
    state = jax.random.normal(ks, (batch, state_size), dtype=jnp.float32)
    action = jax.random.normal(ka, (batch, action_size), dtype=jnp.float32)

    value = critic_forward(state, action, params)
    value = jax.block_until_ready(value)

    # Plain-JAX reference of the same math (with the explicit concat).
    def ref(s, a, p):
        x = jnp.concatenate([s, a], axis=1)
        h1 = jnp.maximum(x @ p["w1"] + p["b1"], 0.0)
        h2 = jnp.maximum(h1 @ p["w2"] + p["b2"], 0.0)
        return h2 @ p["w3"] + p["b3"]

    expected = ref(state, action, params)
    assert value.shape == (batch, 1), value.shape
    assert jnp.allclose(value, expected, atol=1e-5, rtol=1e-5)
    print("KERNEL_OK")
</pallas_src>

<mosaic_0001>
module attributes {stable_mosaic.version = 11 : i64} {
  func.func @critic_kernel(%arg0: i32, %arg1: memref<8x16xf32, #tpu.memory_space<vmem>>, %arg2: memref<8x4xf32, #tpu.memory_space<vmem>>, %arg3: memref<16x32xf32, #tpu.memory_space<vmem>>, %arg4: memref<4x32xf32, #tpu.memory_space<vmem>>, %arg5: memref<1x32xf32, #tpu.memory_space<vmem>>, %arg6: memref<32x32xf32, #tpu.memory_space<vmem>>, %arg7: memref<1x32xf32, #tpu.memory_space<vmem>>, %arg8: memref<32x8xf32, #tpu.memory_space<vmem>>, %arg9: memref<1x8xf32, #tpu.memory_space<vmem>>, %arg10: memref<8x8xf32, #tpu.memory_space<vmem>>) attributes {dimension_semantics = [#tpu.dimension_semantics<parallel>], iteration_bounds = array<i64: 1>, scalar_prefetch = 0 : i64, scratch_operands = 0 : i64, tpu.core_type = #tpu.core_type<tc>, window_params = [{transform_indices = @transform_0, window_bounds = array<i64: 8, 16>}, {transform_indices = @transform_1, window_bounds = array<i64: 8, 4>}, {pipeline_mode = #tpu.pipeline_mode<synchronous>, transform_indices = @transform_2, window_bounds = array<i64: 16, 32>}, {pipeline_mode = #tpu.pipeline_mode<synchronous>, transform_indices = @transform_3, window_bounds = array<i64: 4, 32>}, {pipeline_mode = #tpu.pipeline_mode<synchronous>, transform_indices = @transform_4, window_bounds = array<i64: 1, 32>}, {pipeline_mode = #tpu.pipeline_mode<synchronous>, transform_indices = @transform_5, window_bounds = array<i64: 32, 32>}, {pipeline_mode = #tpu.pipeline_mode<synchronous>, transform_indices = @transform_6, window_bounds = array<i64: 1, 32>}, {pipeline_mode = #tpu.pipeline_mode<synchronous>, transform_indices = @transform_7, window_bounds = array<i64: 32, 8>}, {pipeline_mode = #tpu.pipeline_mode<synchronous>, transform_indices = @transform_8, window_bounds = array<i64: 1, 8>}, {transform_indices = @transform_9, window_bounds = array<i64: 8, 8>}]} {
    %c0 = arith.constant 0 : index
    %c0_0 = arith.constant 0 : index
    %0 = vector.load %arg1[%c0, %c0_0] : memref<8x16xf32, #tpu.memory_space<vmem>>, vector<8x16xf32>
    %c0_1 = arith.constant 0 : index
    %c0_2 = arith.constant 0 : index
    %1 = vector.load %arg3[%c0_1, %c0_2] : memref<16x32xf32, #tpu.memory_space<vmem>>, vector<16x32xf32>
    %cst = arith.constant dense<0.000000e+00> : vector<8x32xf32>
    %2 = tpu.matmul %0, %1, %cst {dimension_numbers = #tpu.dot_dimension_numbers<[1], [0], [0], [1], [0, 0, 1, 1], [], []>} : vector<8x16xf32>, vector<16x32xf32>, vector<8x32xf32> -> vector<8x32xf32>
    %c0_3 = arith.constant 0 : index
    %c0_4 = arith.constant 0 : index
    %3 = vector.load %arg2[%c0_3, %c0_4] : memref<8x4xf32, #tpu.memory_space<vmem>>, vector<8x4xf32>
    %c0_5 = arith.constant 0 : index
    %c0_6 = arith.constant 0 : index
    %4 = vector.load %arg4[%c0_5, %c0_6] : memref<4x32xf32, #tpu.memory_space<vmem>>, vector<4x32xf32>
    %cst_7 = arith.constant dense<0.000000e+00> : vector<8x32xf32>
    %5 = tpu.matmul %3, %4, %cst_7 {dimension_numbers = #tpu.dot_dimension_numbers<[1], [0], [0], [1], [0, 0, 1, 1], [], []>} : vector<8x4xf32>, vector<4x32xf32>, vector<8x32xf32> -> vector<8x32xf32>
    %6 = arith.addf %2, %5 : vector<8x32xf32>
    %c0_8 = arith.constant 0 : index
    %c0_9 = arith.constant 0 : index
    %7 = vector.load %arg5[%c0_8, %c0_9] : memref<1x32xf32, #tpu.memory_space<vmem>>, vector<1x32xf32>
    %8 = vector.broadcast %7 : vector<1x32xf32> to vector<8x32xf32>
    %9 = arith.addf %6, %8 : vector<8x32xf32>
    %cst_10 = arith.constant 0.000000e+00 : f32
    %10 = vector.broadcast %cst_10 : f32 to vector<8x32xf32>
    %11 = arith.maximumf %9, %10 : vector<8x32xf32>
    %c0_11 = arith.constant 0 : index
    %c0_12 = arith.constant 0 : index
    %12 = vector.load %arg6[%c0_11, %c0_12] : memref<32x32xf32, #tpu.memory_space<vmem>>, vector<32x32xf32>
    %cst_13 = arith.constant dense<0.000000e+00> : vector<8x32xf32>
    %13 = tpu.matmul %11, %12, %cst_13 {dimension_numbers = #tpu.dot_dimension_numbers<[1], [0], [0], [1], [0, 0, 1, 1], [], []>} : vector<8x32xf32>, vector<32x32xf32>, vector<8x32xf32> -> vector<8x32xf32>
    %c0_14 = arith.constant 0 : index
    %c0_15 = arith.constant 0 : index
    %14 = vector.load %arg7[%c0_14, %c0_15] : memref<1x32xf32, #tpu.memory_space<vmem>>, vector<1x32xf32>
    %15 = vector.broadcast %14 : vector<1x32xf32> to vector<8x32xf32>
    %16 = arith.addf %13, %15 : vector<8x32xf32>
    %cst_16 = arith.constant 0.000000e+00 : f32
    %17 = vector.broadcast %cst_16 : f32 to vector<8x32xf32>
    %18 = arith.maximumf %16, %17 : vector<8x32xf32>
    %c0_17 = arith.constant 0 : index
    %c0_18 = arith.constant 0 : index
    %19 = vector.load %arg8[%c0_17, %c0_18] : memref<32x8xf32, #tpu.memory_space<vmem>>, vector<32x8xf32>
    %cst_19 = arith.constant dense<0.000000e+00> : vector<8x8xf32>
    %20 = tpu.matmul %18, %19, %cst_19 {dimension_numbers = #tpu.dot_dimension_numbers<[1], [0], [0], [1], [0, 0, 1, 1], [], []>} : vector<8x32xf32>, vector<32x8xf32>, vector<8x8xf32> -> vector<8x8xf32>
    %c0_20 = arith.constant 0 : index
    %c0_21 = arith.constant 0 : index
    %21 = vector.load %arg9[%c0_20, %c0_21] : memref<1x8xf32, #tpu.memory_space<vmem>>, vector<1x8xf32>
    %22 = vector.broadcast %21 : vector<1x8xf32> to vector<8x8xf32>
    %23 = arith.addf %20, %22 : vector<8x8xf32>
    %c0_22 = arith.constant 0 : index
    %c0_23 = arith.constant 0 : index
    %24 = vector.load %arg10[%c0_22, %c0_23] : memref<8x8xf32, #tpu.memory_space<vmem>>, vector<8x8xf32>
    tpu.vector_store %arg10[%c0_22, %c0_23], %23 {strides = array<i32>} : memref<8x8xf32, #tpu.memory_space<vmem>>, vector<8x8xf32>,
    return
  }
  func.func @transform_0(%arg0: i32) -> (i32, i32) {
    %c0_i32 = arith.constant 0 : i32
    %c0_i32_0 = arith.constant 0 : i32
    return %arg0, %c0_i32 : i32, i32
  }
  func.func @transform_1(%arg0: i32) -> (i32, i32) {
    %c0_i32 = arith.constant 0 : i32
    %c0_i32_0 = arith.constant 0 : i32
    return %arg0, %c0_i32 : i32, i32
  }
  func.func @transform_2(%arg0: i32) -> (i32, i32) {
    %c0_i32 = arith.constant 0 : i32
    %c0_i32_0 = arith.constant 0 : i32
    %c0_i32_1 = arith.constant 0 : i32
    return %c0_i32, %c0_i32_0 : i32, i32
  }
  func.func @transform_3(%arg0: i32) -> (i32, i32) {
    %c0_i32 = arith.constant 0 : i32
    %c0_i32_0 = arith.constant 0 : i32
    %c0_i32_1 = arith.constant 0 : i32
    return %c0_i32, %c0_i32_0 : i32, i32
  }
  func.func @transform_4(%arg0: i32) -> (i32, i32) {
    %c0_i32 = arith.constant 0 : i32
    %c0_i32_0 = arith.constant 0 : i32
    %c0_i32_1 = arith.constant 0 : i32
    return %c0_i32, %c0_i32_0 : i32, i32
  }
  func.func @transform_5(%arg0: i32) -> (i32, i32) {
    %c0_i32 = arith.constant 0 : i32
    %c0_i32_0 = arith.constant 0 : i32
    %c0_i32_1 = arith.constant 0 : i32
    return %c0_i32, %c0_i32_0 : i32, i32
  }
  func.func @transform_6(%arg0: i32) -> (i32, i32) {
    %c0_i32 = arith.constant 0 : i32
    %c0_i32_0 = arith.constant 0 : i32
    %c0_i32_1 = arith.constant 0 : i32
    return %c0_i32, %c0_i32_0 : i32, i32
  }
  func.func @transform_7(%arg0: i32) -> (i32, i32) {
    %c0_i32 = arith.constant 0 : i32
    %c0_i32_0 = arith.constant 0 : i32
    %c0_i32_1 = arith.constant 0 : i32
    return %c0_i32, %c0_i32_0 : i32, i32
  }
  func.func @transform_8(%arg0: i32) -> (i32, i32) {
    %c0_i32 = arith.constant 0 : i32
    %c0_i32_0 = arith.constant 0 : i32
    %c0_i32_1 = arith.constant 0 : i32
    return %c0_i32, %c0_i32_0 : i32, i32
  }
  func.func @transform_9(%arg0: i32) -> (i32, i32) {
    %c0_i32 = arith.constant 0 : i32
    %c0_i32_0 = arith.constant 0 : i32
    return %arg0, %c0_i32 : i32, i32
  }
}

</mosaic_0001>

<llo_original>
// kernel: tpu_custom_call.1
$region0: #{tpu_custom_call.1}
  #allocation0 [shape = 'u32[]', space=smem, size = 0x4, offset = 0x4, fixed_abs, tag = 'smem constant byte address 0x4 - core index']
  #allocation1 [shape = 'u32[144,128]{1,0:T(1,128)}', space=vmem, size = 0x12000, scoped, tag = 'internal scratch']
  %s0 = inlined_call_operand.vmem [shape: f32[8,16], index: 0, kind: input, shape index: {}]
  %s1 = inlined_call_operand.vmem [shape: f32[8,4], index: 1, kind: input, shape index: {}]
  %s2 = inlined_call_operand.vmem [shape: f32[16,32], index: 2, kind: input, shape index: {}]
  %s3 = inlined_call_operand.hbm [shape: f32[4,32], index: 3, kind: input, shape index: {}]
  %s4 = inlined_call_operand.vmem [shape: f32[1,32], index: 4, kind: input, shape index: {}]
  %s5 = inlined_call_operand.vmem [shape: f32[32,32], index: 5, kind: input, shape index: {}]
  %s6 = inlined_call_operand.vmem [shape: f32[1,32], index: 6, kind: input, shape index: {}]
  %s7 = inlined_call_operand.vmem [shape: f32[32,8], index: 7, kind: input, shape index: {}]
  %s8 = inlined_call_operand.vmem [shape: f32[1,8], index: 8, kind: input, shape index: {}]
  %s9 = inlined_call_operand.hbm [shape: f32[8,8], index: 9, kind: output, shape index: {}]
  %s10 = sld [smem:[#allocation0]]
  $region50: #{tpu_custom_call.1} parent=0
    _
  %s12 = ssub.s32 1, %s10
  %s13 = scalar_select 0, %s12, %s10
  $region1: #{tpu_custom_call.1} parent=0
    #allocation2 [shape = 'u8[2048]{0}', space=vmem, size = 0x800, scoped, tag = 'input window, operand 3, single buffered']
    #allocation3 [shape = 's32[1]{0}', space=sflag, size = 0x4, scoped, tag = 'scoped memory for tpu_custom_call.1']
    #allocation4 [shape = 's32[1]{0}', space=sflag, size = 0x4, scoped, tag = 'scoped memory for tpu_custom_call.1']
    #allocation5 [shape = 'u8[4096]{0}', space=vmem, size = 0x1000, scoped, tag = 'output window, operand 0, single buffered']
    %14 = vsyncpa [#allocation3], 0
    %15 = vsyncpa [#allocation4], 0
    // Predicated region
    $region2: #{tpu_custom_call.1} parent=1 // pred_check
      _
    $region3: #{tpu_custom_call.1} parent=1 // pred_check_branch
      %17 = sbr.rel (0) target = $region5
    $region4: #{tpu_custom_call.1} parent=1 // pred_region
      _
    $region5: #{tpu_custom_call.1} parent=1 // pred_fallthru
      _
    // Predicated region
    $region6: #{tpu_custom_call.1} parent=1 // pred_check
      _
    $region7: #{tpu_custom_call.1} parent=1 // pred_check_branch
      %19 = sbr.rel (0) target = $region9
    $region8: #{tpu_custom_call.1} parent=1 // pred_region
      _
    $region9: #{tpu_custom_call.1} parent=1 // pred_fallthru
      _
    // Predicated region
    $region10: #{tpu_custom_call.1} parent=1 // pred_check
      _
    $region11: #{tpu_custom_call.1} parent=1 // pred_check_branch
      %21 = sbr.rel (0) target = $region13
    $region12: #{tpu_custom_call.1} parent=1 // pred_region
      _
    $region13: #{tpu_custom_call.1} parent=1 // pred_fallthru
      _
    // Predicated region
    $region14: #{tpu_custom_call.1} parent=1 // pred_check
      _
    $region15: #{tpu_custom_call.1} parent=1 // pred_check_branch
      %23 = sbr.rel (0) target = $region17
    $region16: #{tpu_custom_call.1} parent=1 // pred_region
      %s25 = ssub.s32 64, 64
      %26 = vsyncadd [#allocation3], %s25
      %s28 = sshll.u32 [#allocation2], 4
      %s29 = int_to_ptr.vmem [resolvable:$true] %s28
      %31 = dma.hbm_to_vmem [thread:$0]  %s3, 64, %s29, [#allocation3]
    $region17: #{tpu_custom_call.1} parent=1 // pred_fallthru
      _
    // Predicated region
    $region18: #{tpu_custom_call.1} parent=1 // pred_check
      _
    $region19: #{tpu_custom_call.1} parent=1 // pred_check_branch
      %33 = sbr.rel (0) target = $region21
    $region20: #{tpu_custom_call.1} parent=1 // pred_region
      _
    $region21: #{tpu_custom_call.1} parent=1 // pred_fallthru
      _
    // Predicated region
    $region22: #{tpu_custom_call.1} parent=1 // pred_check
      _
    $region23: #{tpu_custom_call.1} parent=1 // pred_check_branch
      %35 = sbr.rel (0) target = $region25
    $region24: #{tpu_custom_call.1} parent=1 // pred_region
      _
    $region25: #{tpu_custom_call.1} parent=1 // pred_fallthru
      _
    // Predicated region
    $region26: #{tpu_custom_call.1} parent=1 // pred_check
      _
    $region27: #{tpu_custom_call.1} parent=1 // pred_check_branch
      %37 = sbr.rel (0) target = $region29
    $region28: #{tpu_custom_call.1} parent=1 // pred_region
      _
    $region29: #{tpu_custom_call.1} parent=1 // pred_fallthru
      _
    // Predicated region
    $region30: #{tpu_custom_call.1} parent=1 // pred_check
      _
    $region31: #{tpu_custom_call.1} parent=1 // pred_check_branch
      %39 = sbr.rel (0) target = $region33
    $region32: #{tpu_custom_call.1} parent=1 // pred_region
      _
    $region33: #{tpu_custom_call.1} parent=1 // pred_fallthru
      _
    // Predicated region
    $region34: #{tpu_custom_call.1} parent=1 // pred_check
      _
    $region35: #{tpu_custom_call.1} parent=1 // pred_check_branch
      %41 = sbr.rel (0) target = $region37
    $region36: #{tpu_custom_call.1} parent=1 // pred_region
      _
    $region37: #{tpu_custom_call.1} parent=1 // pred_fallthru
      _
    // Predicated region
    $region38: #{tpu_custom_call.1} parent=1 // pred_check
      _
    $region39: #{tpu_custom_call.1} parent=1 // pred_check_branch
      %43 = sbr.rel (0) target = $region41
    $region40: #{tpu_custom_call.1} parent=1 // pred_region
      %44 = dma.done [#allocation3], 64
    $region41: #{tpu_custom_call.1} parent=1 // pred_fallthru
      _
    %v45 = vld [vmem:[%s0] sm:$0xff]
    %v46 = vld [vmem:[%s2] sm:$0xff]
    %v47 = vld [vmem:[%s2 + $0x8] sm:$0xff]
    %v48 = vld [vmem:[%s1] sm:$0xff]
    %v49 = vld [vmem:[#allocation2] sm:$0xf]
    %vm50 = vcmask 31744
    %v52 = vsel %vm50, %v48, 0
    %vm54 = vcmask 1043456
    %v56 = vsel %vm54, %v49, 0
    %58 = vmatprep.subr.mxu0 0.0
    %59 = vmatpush1.msra.mxu0 %v56
    %60 = vmatprep.subr.mxu0 0.0
    %61 = vmatpush1.msra.mxu0 0.0
    %62 = vmatprep.subr.mxu0 0.0
    %63 = vmatpush1.msra.mxu0 0.0
    %64 = vmatprep.subr.mxu0 0.0
    %65 = vmatpush1.msra.mxu0 0.0
    %66 = vmatprep.subr.mxu0 0.0
    %67 = vmatpush1.msra.mxu0 0.0
    %68 = vmatprep.subr.mxu0 0.0
    %69 = vmatpush1.msra.mxu0 0.0
    %70 = vmatprep.subr.mxu0 0.0
    %71 = vmatpush1.msra.mxu0 0.0
    %72 = vmatprep.subr.mxu0 0.0
    %73 = vmatpush1.msra.mxu0 0.0
    %74 = vmatprep.subr.mxu0 0.0
    %75 = vmatpush1.msra.mxu0 0.0
    %76 = vmatprep.subr.mxu0 0.0
    %77 = vmatpush1.msra.mxu0 0.0
    %78 = vmatprep.subr.mxu0 0.0
    %79 = vmatpush1.msra.mxu0 0.0
    %80 = vmatprep.subr.mxu0 0.0
    %81 = vmatpush1.msra.mxu0 0.0
    %82 = vmatprep.subr.mxu0 0.0
    %83 = vmatpush1.msra.mxu0 0.0
    %84 = vmatprep.subr.mxu0 0.0
    %85 = vmatpush1.msra.mxu0 0.0
    %86 = vmatprep.subr.mxu0 0.0
    %87 = vmatpush1.msra.mxu0 0.0
    %88 = vmatprep.subr.mxu0 0.0
    %89 = vmatpush1.msra.mxu0 0.0
    %90 = vmatprep.subr.mxu0 0.0
    %91 = vmatpush1.msra.mxu0 0.0
    %92 = vmatprep.subr.mxu0 0.0
    %93 = vmatpush1.msra.mxu0 0.0
    %94 = vmatprep.subr.mxu0 0.0
    %95 = vmatpush1.msra.mxu0 0.0
    %96 = vmatprep.subr.mxu0 0.0
    %97 = vmatpush1.msra.mxu0 0.0
    %98 = vmatprep.subr.mxu0 0.0
    %99 = vmatpush1.msra.mxu0 0.0
    %100 = vmatprep.subr.mxu0 0.0
    %101 = vmatpush1.msra.mxu0 0.0
    %102 = vmatprep.subr.mxu0 0.0
    %103 = vmatpush1.msra.mxu0 0.0
    %104 = vmatprep.subr.mxu0 0.0
    %105 = vmatpush1.msra.mxu0 0.0
    %106 = vmatprep.subr.mxu0 0.0
    %107 = vmatpush1.msra.mxu0 0.0
    %108 = vmatprep.subr.mxu0 0.0
    %109 = vmatpush1.msra.mxu0 0.0
    %110 = vmatprep.subr.mxu0 0.0
    %111 = vmatpush1.msra.mxu0 0.0
    %112 = vmatprep.subr.mxu0 0.0
    %113 = vmatpush1.msra.mxu0 0.0
    %114 = vmatprep.subr.mxu0 0.0
    %115 = vmatpush1.msra.mxu0 0.0
    %116 = vmatprep.subr.mxu0 0.0
    %117 = vmatpush1.msra.mxu0 0.0
    %118 = vmatprep.subr.mxu0 0.0
    %119 = vmatpush1.msra.mxu0 0.0
    %120 = vmatprep.subr.mxu0 0.0
    %121 = vmatpush1.msra.mxu0 0.0
    %122 = vmatprep.mubr.f32.mxu0 0.0
    %123 = vmatmul.mubr.f32.gmra.mrb[0].mxu0 %v52
    %v124 = vpop.f32.mrb[0].mxu0
    %v125 = vadd.f32 0.0, %v124
    %v126 = vpop.f32.mrb[0].mxu0
    %127 = vdwg.mxu0
    %vm128 = vcmask 130048
    %v130 = vsel %vm128, %v45, 0
    %132 = vmatprep.subr.mxu0 0.0
    %133 = vmatpush1.msra.mxu0 %v46
    %134 = vmatprep.subr.mxu0 0.0
    %135 = vmatpush1.msra.mxu0 %v47
    %136 = vmatprep.subr.mxu0 0.0
    %137 = vmatpush1.msra.mxu0 0.0
    %138 = vmatprep.subr.mxu0 0.0
    %139 = vmatpush1.msra.mxu0 0.0
    %140 = vmatprep.subr.mxu0 0.0
    %141 = vmatpush1.msra.mxu0 0.0
    %142 = vmatprep.subr.mxu0 0.0
    %143 = vmatpush1.msra.mxu0 0.0
    %144 = vmatprep.subr.mxu0 0.0
    %145 = vmatpush1.msra.mxu0 0.0
    %146 = vmatprep.subr.mxu0 0.0
    %147 = vmatpush1.msra.mxu0 0.0
    %148 = vmatprep.subr.mxu0 0.0
    %149 = vmatpush1.msra.mxu0 0.0
    %150 = vmatprep.subr.mxu0 0.0
    %151 = vmatpush1.msra.mxu0 0.0
    %152 = vmatprep.subr.mxu0 0.0
    %153 = vmatpush1.msra.mxu0 0.0
    %154 = vmatprep.subr.mxu0 0.0
    %155 = vmatpush1.msra.mxu0 0.0
    %156 = vmatprep.subr.mxu0 0.0
    %157 = vmatpush1.msra.mxu0 0.0
    %158 = vmatprep.subr.mxu0 0.0
    %159 = vmatpush1.msra.mxu0 0.0
    %160 = vmatprep.subr.mxu0 0.0
    %161 = vmatpush1.msra.mxu0 0.0
    %162 = vmatprep.subr.mxu0 0.0
    %163 = vmatpush1.msra.mxu0 0.0
    %164 = vmatprep.subr.mxu0 0.0
    %165 = vmatpush1.msra.mxu0 0.0
    %166 = vmatprep.subr.mxu0 0.0
    %167 = vmatpush1.msra.mxu0 0.0
    %168 = vmatprep.subr.mxu0 0.0
    %169 = vmatpush1.msra.mxu0 0.0
    %170 = vmatprep.subr.mxu0 0.0
    %171 = vmatpush1.msra.mxu0 0.0
    %172 = vmatprep.subr.mxu0 0.0
    %173 = vmatpush1.msra.mxu0 0.0
    %174 = vmatprep.subr.mxu0 0.0
    %175 = vmatpush1.msra.mxu0 0.0
    %176 = vmatprep.subr.mxu0 0.0
    %177 = vmatpush1.msra.mxu0 0.0
    %178 = vmatprep.subr.mxu0 0.0
    %179 = vmatpush1.msra.mxu0 0.0
    %180 = vmatprep.subr.mxu0 0.0
    %181 = vmatpush1.msra.mxu0 0.0
    %182 = vmatprep.subr.mxu0 0.0
    %183 = vmatpush1.msra.mxu0 0.0
    %184 = vmatprep.subr.mxu0 0.0
    %185 = vmatpush1.msra.mxu0 0.0
    %186 = vmatprep.subr.mxu0 0.0
    %187 = vmatpush1.msra.mxu0 0.0
    %188 = vmatprep.subr.mxu0 0.0
    %189 = vmatpush1.msra.mxu0 0.0
    %190 = vmatprep.subr.mxu0 0.0
    %191 = vmatpush1.msra.mxu0 0.0
    %192 = vmatprep.subr.mxu0 0.0
    %193 = vmatpush1.msra.mxu0 0.0
    %194 = vmatprep.subr.mxu0 0.0
    %195 = vmatpush1.msra.mxu0 0.0
    %196 = vmatprep.mubr.f32.mxu0 0.0
    %197 = vmatmul.mubr.f32.gmra.mrb[0].mxu0 %v130
    %v198 = vpop.f32.mrb[0].mxu0
    %v199 = vadd.f32 %v125, %v198
    %v200 = vpop.f32.mrb[0].mxu0
    %201 = vdwg.mxu0
    %v202 = vld [vmem:[%s4] sm:$0x1]
    %v204 = vlaneseq
    %v205 = vshrl.u32 %v204, 7
    %v206 = vsub.s32 0, %v205
    %v207 = vrot.slane %v202, %v206
    %v209 = vadd.f32 %v199, %v207
    %v210 = vmax.f32 %v209, 0.0
    %v211 = vld [vmem:[%s5] sm:$0xff]
    %v212 = vld [vmem:[%s5 + $0x8] sm:$0xff]
    %v213 = vld [vmem:[%s5 + $0x10] sm:$0xff]
    %v214 = vld [vmem:[%s5 + $0x18] sm:$0xff]
    %v215 = vld [vmem:[%s6] sm:$0x1]
    %v217 = vlaneseq
    %v218 = vshrl.u32 %v217, 7
    %v219 = vsub.s32 0, %v218
    %v220 = vrot.slane %v215, %v219
    %vm222 = vcmask 261120
    %v224 = vsel %vm222, %v210, 0
    %226 = vmatprep.subr.mxu0 0.0
    %227 = vmatpush1.msra.mxu0 %v211
    %228 = vmatprep.subr.mxu0 0.0
    %229 = vmatpush1.msra.mxu0 %v212
    %230 = vmatprep.subr.mxu0 0.0
    %231 = vmatpush1.msra.mxu0 %v213
    %232 = vmatprep.subr.mxu0 0.0
    %233 = vmatpush1.msra.mxu0 %v214
    %234 = vmatprep.subr.mxu0 0.0
    %235 = vmatpush1.msra.mxu0 0.0
    %236 = vmatprep.subr.mxu0 0.0
    %237 = vmatpush1.msra.mxu0 0.0
    %238 = vmatprep.subr.mxu0 0.0
    %239 = vmatpush1.msra.mxu0 0.0
    %240 = vmatprep.subr.mxu0 0.0
    %241 = vmatpush1.msra.mxu0 0.0
    %242 = vmatprep.subr.mxu0 0.0
    %243 = vmatpush1.msra.mxu0 0.0
    %244 = vmatprep.subr.mxu0 0.0
    %245 = vmatpush1.msra.mxu0 0.0
    %246 = vmatprep.subr.mxu0 0.0
    %247 = vmatpush1.msra.mxu0 0.0
    %248 = vmatprep.subr.mxu0 0.0
    %249 = vmatpush1.msra.mxu0 0.0
    %250 = vmatprep.subr.mxu0 0.0
    %251 = vmatpush1.msra.mxu0 0.0
    %252 = vmatprep.subr.mxu0 0.0
    %253 = vmatpush1.msra.mxu0 0.0
    %254 = vmatprep.subr.mxu0 0.0
    %255 = vmatpush1.msra.mxu0 0.0
    %256 = vmatprep.subr.mxu0 0.0
    %257 = vmatpush1.msra.mxu0 0.0
    %258 = vmatprep.subr.mxu0 0.0
    %259 = vmatpush1.msra.mxu0 0.0
    %260 = vmatprep.subr.mxu0 0.0
    %261 = vmatpush1.msra.mxu0 0.0
    %262 = vmatprep.subr.mxu0 0.0
    %263 = vmatpush1.msra.mxu0 0.0
    %264 = vmatprep.subr.mxu0 0.0
    %265 = vmatpush1.msra.mxu0 0.0
    %266 = vmatprep.subr.mxu0 0.0
    %267 = vmatpush1.msra.mxu0 0.0
    %268 = vmatprep.subr.mxu0 0.0
    %269 = vmatpush1.msra.mxu0 0.0
    %270 = vmatprep.subr.mxu0 0.0
    %271 = vmatpush1.msra.mxu0 0.0
    %272 = vmatprep.subr.mxu0 0.0
    %273 = vmatpush1.msra.mxu0 0.0
    %274 = vmatprep.subr.mxu0 0.0
    %275 = vmatpush1.msra.mxu0 0.0
    %276 = vmatprep.subr.mxu0 0.0
    %277 = vmatpush1.msra.mxu0 0.0
    %278 = vmatprep.subr.mxu0 0.0
    %279 = vmatpush1.msra.mxu0 0.0
    %280 = vmatprep.subr.mxu0 0.0
    %281 = vmatpush1.msra.mxu0 0.0
    %282 = vmatprep.subr.mxu0 0.0
    %283 = vmatpush1.msra.mxu0 0.0
    %284 = vmatprep.subr.mxu0 0.0
    %285 = vmatpush1.msra.mxu0 0.0
    %286 = vmatprep.subr.mxu0 0.0
    %287 = vmatpush1.msra.mxu0 0.0
    %288 = vmatprep.subr.mxu0 0.0
    %289 = vmatpush1.msra.mxu0 0.0
    %290 = vmatprep.mubr.f32.mxu0 0.0
    %291 = vmatmul.mubr.f32.gmra.mrb[0].mxu0 %v224
    %v292 = vpop.f32.mrb[0].mxu0
    %v293 = vadd.f32 %v220, %v292
    %v294 = vpop.f32.mrb[0].mxu0
    %295 = vdwg.mxu0
    %v296 = vmax.f32 %v293, 0.0
    %v297 = vld [vmem:[%s7] sm:$0xff]
    %v298 = vld [vmem:[%s7 + $0x8] sm:$0xff]
    %v299 = vld [vmem:[%s7 + $0x10] sm:$0xff]
    %v300 = vld [vmem:[%s7 + $0x18] sm:$0xff]
    %v301 = vld [vmem:[%s8] sm:$0x1]
    %v303 = vlaneseq
    %v304 = vshrl.u32 %v303, 7
    %v305 = vsub.s32 0, %v304
    %v306 = vrot.slane %v301, %v305
    %v309 = vsel %vm222, %v296, 0
    %311 = vmatprep.subr.mxu0 0.0
    %312 = vmatpush1.msra.mxu0 %v297
    %313 = vmatprep.subr.mxu0 0.0
    %314 = vmatpush1.msra.mxu0 %v298
    %315 = vmatprep.subr.mxu0 0.0
    %316 = vmatpush1.msra.mxu0 %v299
    %317 = vmatprep.subr.mxu0 0.0
    %318 = vmatpush1.msra.mxu0 %v300
    %319 = vmatprep.subr.mxu0 0.0
    %320 = vmatpush1.msra.mxu0 0.0
    %321 = vmatprep.subr.mxu0 0.0
    %322 = vmatpush1.msra.mxu0 0.0
    %323 = vmatprep.subr.mxu0 0.0
    %324 = vmatpush1.msra.mxu0 0.0
    %325 = vmatprep.subr.mxu0 0.0
    %326 = vmatpush1.msra.mxu0 0.0
    %327 = vmatprep.subr.mxu0 0.0
    %328 = vmatpush1.msra.mxu0 0.0
    %329 = vmatprep.subr.mxu0 0.0
    %330 = vmatpush1.msra.mxu0 0.0
    %331 = vmatprep.subr.mxu0 0.0
    %332 = vmatpush1.msra.mxu0 0.0
    %333 = vmatprep.subr.mxu0 0.0
    %334 = vmatpush1.msra.mxu0 0.0
    %335 = vmatprep.subr.mxu0 0.0
    %336 = vmatpush1.msra.mxu0 0.0
    %337 = vmatprep.subr.mxu0 0.0
    %338 = vmatpush1.msra.mxu0 0.0
    %339 = vmatprep.subr.mxu0 0.0
    %340 = vmatpush1.msra.mxu0 0.0
    %341 = vmatprep.subr.mxu0 0.0
    %342 = vmatpush1.msra.mxu0 0.0
    %343 = vmatprep.subr.mxu0 0.0
    %344 = vmatpush1.msra.mxu0 0.0
    %345 = vmatprep.subr.mxu0 0.0
    %346 = vmatpush1.msra.mxu0 0.0
    %347 = vmatprep.subr.mxu0 0.0
    %348 = vmatpush1.msra.mxu0 0.0
    %349 = vmatprep.subr.mxu0 0.0
    %350 = vmatpush1.msra.mxu0 0.0
    %351 = vmatprep.subr.mxu0 0.0
    %352 = vmatpush1.msra.mxu0 0.0
    %353 = vmatprep.subr.mxu0 0.0
    %354 = vmatpush1.msra.mxu0 0.0
    %355 = vmatprep.subr.mxu0 0.0
    %356 = vmatpush1.msra.mxu0 0.0
    %357 = vmatprep.subr.mxu0 0.0
    %358 = vmatpush1.msra.mxu0 0.0
    %359 = vmatprep.subr.mxu0 0.0
    %360 = vmatpush1.msra.mxu0 0.0
    %361 = vmatprep.subr.mxu0 0.0
    %362 = vmatpush1.msra.mxu0 0.0
    %363 = vmatprep.subr.mxu0 0.0
    %364 = vmatpush1.msra.mxu0 0.0
    %365 = vmatprep.subr.mxu0 0.0
    %366 = vmatpush1.msra.mxu0 0.0
    %367 = vmatprep.subr.mxu0 0.0
    %368 = vmatpush1.msra.mxu0 0.0
    %369 = vmatprep.subr.mxu0 0.0
    %370 = vmatpush1.msra.mxu0 0.0
    %371 = vmatprep.subr.mxu0 0.0
    %372 = vmatpush1.msra.mxu0 0.0
    %373 = vmatprep.subr.mxu0 0.0
    %374 = vmatpush1.msra.mxu0 0.0
    %375 = vmatprep.mubr.f32.mxu0 0.0
    %376 = vmatmul.mubr.f32.gmra.mrb[0].mxu0 %v309
    %v377 = vpop.f32.mrb[0].mxu0
    %v378 = vadd.f32 %v306, %v377
    %v379 = vpop.f32.mrb[0].mxu0
    %380 = vdwg.mxu0
    %vm381 = vcmask 64512
    %382 = vst.msk [vmem:[#allocation5] sm:$0xff] %vm381, %v378
    // Predicated region
    $region42: #{tpu_custom_call.1} parent=1 // pred_check
      _
    $region43: #{tpu_custom_call.1} parent=1 // pred_check_branch
      %384 = sbr.rel (0) target = $region45
    $region44: #{tpu_custom_call.1} parent=1 // pred_region
      %s386 = ssub.s32 128, 128
      %387 = vsyncadd [#allocation4], %s386
      %s389 = sshll.u32 [#allocation5], 4
      %s390 = int_to_ptr.vmem [resolvable:$true] %s389
      %392 = dma.vmem_to_hbm [thread:$0]  %s390, 128, %s9, [#allocation4]
    $region45: #{tpu_custom_call.1} parent=1 // pred_fallthru
      _
    // Predicated region
    $region46: #{tpu_custom_call.1} parent=1 // pred_check
      _
    $region47: #{tpu_custom_call.1} parent=1 // pred_check_branch
      %394 = sbr.rel (0) target = $region49
    $region48: #{tpu_custom_call.1} parent=1 // pred_region
      %395 = dma.done [#allocation4], 128
    $region49: #{tpu_custom_call.1} parent=1 // pred_fallthru
      _
    %396 = vsyncpa [#allocation3], 1
    %397 = vsyncpa [#allocation4], 1

</llo_original>
